<compile_context>
chip_gen: v5e
topology: v5e:2x2
jax: 0.10.0
libtpu: 0.0.40
codegen_flags: <defaults>
</compile_context>

<pallas_src>
import jax
import jax.numpy as jnp
from jax.experimental import pallas as pl
from jax.experimental.pallas import tpu as pltpu


def _actor_kernel(lim_ref, x_ref, w1_ref, b1_ref, w2_ref, b2_ref,
                  w3_ref, b3_ref, w4_ref, b4_ref, o_ref):
    lim = lim_ref[0, 0]                       # SMEM scalar read (scalar slot)
    # fc1 + ReLU
    h = jnp.dot(x_ref[...], w1_ref[...], preferred_element_type=jnp.float32)
    h = jnp.maximum(h + b1_ref[...], 0.0)
    # fc2 + ReLU
    h = jnp.dot(h, w2_ref[...], preferred_element_type=jnp.float32)
    h = jnp.maximum(h + b2_ref[...], 0.0)
    # fc3 + ReLU
    h = jnp.dot(h, w3_ref[...], preferred_element_type=jnp.float32)
    h = jnp.maximum(h + b3_ref[...], 0.0)
    # fc4 + tanh (EUP), scaled by action_lim
    h = jnp.dot(h, w4_ref[...], preferred_element_type=jnp.float32)
    a = jnp.tanh(h + b4_ref[...])
    o_ref[...] = (a * lim).astype(o_ref.dtype)


def actor_forward(state, params, action_lim, *, tile_n=512):
    """Fused forward pass of the Actor MLP.

    state : [N, state_dim] float32
    params: dict with w1..w4 in kernel layout [in, out] and b1..b4 as [1, out]
            (use params_from_torch_layout() once to convert PyTorch params).
    """
    n, state_dim = state.shape
    action_dim = params["w4"].shape[1]

    # Batch tile: multiple of 8 (sublane), no larger than the padded batch.
    tile_n = max(8, (tile_n // 8) * 8)
    tile_n = min(tile_n, max(8, -(-n // 8) * 8))
    n_pad = -(-n // tile_n) * tile_n
    x = state if n_pad == n else jnp.pad(state, ((0, n_pad - n), (0, 0)))

    lim = jnp.asarray(action_lim, jnp.float32).reshape(1, 1)

    # Weights/biases: full block, same block index every grid step
    # -> fetched once, VMEM-resident for the whole grid.
    resident = lambda a: pl.BlockSpec(a.shape, lambda i: (0,) * a.ndim)

    args = (lim, x,
            params["w1"], params["b1"], params["w2"], params["b2"],
            params["w3"], params["b3"], params["w4"], params["b4"])

    in_specs = [
        pl.BlockSpec((1, 1), lambda i: (0, 0),
                     memory_space=pltpu.MemorySpace.SMEM),      # action_lim
        pl.BlockSpec((tile_n, state_dim), lambda i: (i, 0)),    # state tile
    ] + [resident(a) for a in args[2:]]

    out = pl.pallas_call(
        _actor_kernel,
        out_shape=jax.ShapeDtypeStruct((n_pad, action_dim), jnp.float32),
        grid=(n_pad // tile_n,),
        in_specs=in_specs,
        out_specs=pl.BlockSpec((tile_n, action_dim), lambda i: (i, 0)),
        compiler_params=pltpu.CompilerParams(
            dimension_semantics=("parallel",)),   # 2-TC sharding on v7x
    )(*args)
    return out[:n]


def params_from_torch_layout(torch_params):
    """One-time conversion from PyTorch layout (w: [out,in], b: [out])
    to the kernel layout (w: [in,out], b: [1,out])."""
    out = {}
    for i in range(1, 5):
        out[f"w{i}"] = jnp.asarray(torch_params[f"w{i}"]).T
        out[f"b{i}"] = jnp.asarray(torch_params[f"b{i}"]).reshape(1, -1)
    return out


def init_actor_params(key, state_dim, action_dim):
    """Deterministic init matching the PyTorch module
    (weights ~ U(-0.1, 0.1), biases ~ U(0.1, 1.0)), stored directly in
    kernel layout: w as [in, out], b as [1, out]."""
    dims = [(state_dim, 256), (256, 128), (128, 64), (64, action_dim)]
    params = {}
    for i, (in_d, out_d) in enumerate(dims, start=1):
        key, kw, kb = jax.random.split(key, 3)
        params[f"w{i}"] = jax.random.uniform(
            kw, (in_d, out_d), jnp.float32, minval=-0.1, maxval=0.1)
        params[f"b{i}"] = jax.random.uniform(
            kb, (1, out_d), jnp.float32, minval=0.1, maxval=1.0)
    return params


def actor_reference(state, params, action_lim):
    """Pure-JAX reference reproducing the PyTorch forward exactly."""
    x = jax.nn.relu(state @ params["w1"] + params["b1"])
    x = jax.nn.relu(x @ params["w2"] + params["b2"])
    x = jax.nn.relu(x @ params["w3"] + params["b3"])
    return jnp.tanh(x @ params["w4"] + params["b4"]) * action_lim


if __name__ == "__main__":
    state_dim = 8
    action_dim = 4
    action_lim = 2.0

    key = jax.random.PRNGKey(0)
    key, k_small, k_big = jax.random.split(key, 3)
    params = init_actor_params(key, state_dim, action_dim)

    # Small latency-style batch.
    state = jax.random.normal(k_small, (8, state_dim), jnp.float32)
    out = jax.block_until_ready(actor_forward(state, params, action_lim))
    ref = actor_reference(state, params, action_lim)
    assert out.shape == (8, action_dim)
    assert jnp.allclose(out, ref, atol=1e-5, rtol=1e-5), (
        f"max abs err = {jnp.max(jnp.abs(out - ref))}")

    # Larger, non-tile-aligned batch to exercise padding + the tiled grid path.
    state_big = jax.random.normal(k_big, (300, state_dim), jnp.float32)
    out_big = jax.block_until_ready(
        actor_forward(state_big, params, action_lim, tile_n=128))
    ref_big = actor_reference(state_big, params, action_lim)
    assert out_big.shape == (300, action_dim)
    assert jnp.allclose(out_big, ref_big, atol=1e-5, rtol=1e-5), (
        f"max abs err = {jnp.max(jnp.abs(out_big - ref_big))}")

    print("KERNEL_OK")
</pallas_src>

<mosaic_0001>
module attributes {stable_mosaic.version = 11 : i64} {
  func.func @_actor_kernel(%arg0: i32, %arg1: memref<1x1xf32, #tpu.memory_space<smem>>, %arg2: memref<8x8xf32, #tpu.memory_space<vmem>>, %arg3: memref<8x256xf32, #tpu.memory_space<vmem>>, %arg4: memref<1x256xf32, #tpu.memory_space<vmem>>, %arg5: memref<256x128xf32, #tpu.memory_space<vmem>>, %arg6: memref<1x128xf32, #tpu.memory_space<vmem>>, %arg7: memref<128x64xf32, #tpu.memory_space<vmem>>, %arg8: memref<1x64xf32, #tpu.memory_space<vmem>>, %arg9: memref<64x4xf32, #tpu.memory_space<vmem>>, %arg10: memref<1x4xf32, #tpu.memory_space<vmem>>, %arg11: memref<8x4xf32, #tpu.memory_space<vmem>>) attributes {dimension_semantics = [#tpu.dimension_semantics<parallel>], iteration_bounds = array<i64: 1>, scalar_prefetch = 0 : i64, scratch_operands = 0 : i64, tpu.core_type = #tpu.core_type<tc>, window_params = [{transform_indices = @transform_0, window_bounds = array<i64: 1, 1>}, {transform_indices = @transform_1, window_bounds = array<i64: 8, 8>}, {pipeline_mode = #tpu.pipeline_mode<synchronous>, transform_indices = @transform_2, window_bounds = array<i64: 8, 256>}, {pipeline_mode = #tpu.pipeline_mode<synchronous>, transform_indices = @transform_3, window_bounds = array<i64: 1, 256>}, {pipeline_mode = #tpu.pipeline_mode<synchronous>, transform_indices = @transform_4, window_bounds = array<i64: 256, 128>}, {pipeline_mode = #tpu.pipeline_mode<synchronous>, transform_indices = @transform_5, window_bounds = array<i64: 1, 128>}, {pipeline_mode = #tpu.pipeline_mode<synchronous>, transform_indices = @transform_6, window_bounds = array<i64: 128, 64>}, {pipeline_mode = #tpu.pipeline_mode<synchronous>, transform_indices = @transform_7, window_bounds = array<i64: 1, 64>}, {pipeline_mode = #tpu.pipeline_mode<synchronous>, transform_indices = @transform_8, window_bounds = array<i64: 64, 4>}, {pipeline_mode = #tpu.pipeline_mode<synchronous>, transform_indices = @transform_9, window_bounds = array<i64: 1, 4>}, {transform_indices = @transform_10, window_bounds = array<i64: 8, 4>}]} {
    %c0 = arith.constant 0 : index
    %c0_0 = arith.constant 0 : index
    %0 = memref.load %arg1[%c0, %c0_0] : memref<1x1xf32, #tpu.memory_space<smem>>
    %c0_1 = arith.constant 0 : index
    %c0_2 = arith.constant 0 : index
    %1 = vector.load %arg2[%c0_1, %c0_2] : memref<8x8xf32, #tpu.memory_space<vmem>>, vector<8x8xf32>
    %c0_3 = arith.constant 0 : index
    %c0_4 = arith.constant 0 : index
    %2 = vector.load %arg3[%c0_3, %c0_4] : memref<8x256xf32, #tpu.memory_space<vmem>>, vector<8x256xf32>
    %cst = arith.constant dense<0.000000e+00> : vector<8x256xf32>
    %3 = tpu.matmul %1, %2, %cst {dimension_numbers = #tpu.dot_dimension_numbers<[1], [0], [0], [1], [0, 0, 1, 1], [], []>} : vector<8x8xf32>, vector<8x256xf32>, vector<8x256xf32> -> vector<8x256xf32>
    %c0_5 = arith.constant 0 : index
    %c0_6 = arith.constant 0 : index
    %4 = vector.load %arg4[%c0_5, %c0_6] : memref<1x256xf32, #tpu.memory_space<vmem>>, vector<1x256xf32>
    %5 = vector.broadcast %4 : vector<1x256xf32> to vector<8x256xf32>
    %6 = arith.addf %3, %5 : vector<8x256xf32>
    %cst_7 = arith.constant 0.000000e+00 : f32
    %7 = vector.broadcast %cst_7 : f32 to vector<8x256xf32>
    %8 = arith.maximumf %6, %7 : vector<8x256xf32>
    %c0_8 = arith.constant 0 : index
    %c0_9 = arith.constant 0 : index
    %9 = vector.load %arg5[%c0_8, %c0_9] : memref<256x128xf32, #tpu.memory_space<vmem>>, vector<256x128xf32>
    %cst_10 = arith.constant dense<0.000000e+00> : vector<8x128xf32>
    %10 = tpu.matmul %8, %9, %cst_10 {dimension_numbers = #tpu.dot_dimension_numbers<[1], [0], [0], [1], [0, 0, 1, 1], [], []>} : vector<8x256xf32>, vector<256x128xf32>, vector<8x128xf32> -> vector<8x128xf32>
    %c0_11 = arith.constant 0 : index
    %c0_12 = arith.constant 0 : index
    %11 = vector.load %arg6[%c0_11, %c0_12] : memref<1x128xf32, #tpu.memory_space<vmem>>, vector<1x128xf32>
    %12 = vector.broadcast %11 : vector<1x128xf32> to vector<8x128xf32>
    %13 = arith.addf %10, %12 : vector<8x128xf32>
    %cst_13 = arith.constant 0.000000e+00 : f32
    %14 = vector.broadcast %cst_13 : f32 to vector<8x128xf32>
    %15 = arith.maximumf %13, %14 : vector<8x128xf32>
    %c0_14 = arith.constant 0 : index
    %c0_15 = arith.constant 0 : index
    %16 = vector.load %arg7[%c0_14, %c0_15] : memref<128x64xf32, #tpu.memory_space<vmem>>, vector<128x64xf32>
    %cst_16 = arith.constant dense<0.000000e+00> : vector<8x64xf32>
    %17 = tpu.matmul %15, %16, %cst_16 {dimension_numbers = #tpu.dot_dimension_numbers<[1], [0], [0], [1], [0, 0, 1, 1], [], []>} : vector<8x128xf32>, vector<128x64xf32>, vector<8x64xf32> -> vector<8x64xf32>
    %c0_17 = arith.constant 0 : index
    %c0_18 = arith.constant 0 : index
    %18 = vector.load %arg8[%c0_17, %c0_18] : memref<1x64xf32, #tpu.memory_space<vmem>>, vector<1x64xf32>
    %19 = vector.broadcast %18 : vector<1x64xf32> to vector<8x64xf32>
    %20 = arith.addf %17, %19 : vector<8x64xf32>
    %cst_19 = arith.constant 0.000000e+00 : f32
    %21 = vector.broadcast %cst_19 : f32 to vector<8x64xf32>
    %22 = arith.maximumf %20, %21 : vector<8x64xf32>
    %c0_20 = arith.constant 0 : index
    %c0_21 = arith.constant 0 : index
    %23 = vector.load %arg9[%c0_20, %c0_21] : memref<64x4xf32, #tpu.memory_space<vmem>>, vector<64x4xf32>
    %cst_22 = arith.constant dense<0.000000e+00> : vector<8x4xf32>
    %24 = tpu.matmul %22, %23, %cst_22 {dimension_numbers = #tpu.dot_dimension_numbers<[1], [0], [0], [1], [0, 0, 1, 1], [], []>} : vector<8x64xf32>, vector<64x4xf32>, vector<8x4xf32> -> vector<8x4xf32>
    %c0_23 = arith.constant 0 : index
    %c0_24 = arith.constant 0 : index
    %25 = vector.load %arg10[%c0_23, %c0_24] : memref<1x4xf32, #tpu.memory_space<vmem>>, vector<1x4xf32>
    %26 = vector.broadcast %25 : vector<1x4xf32> to vector<8x4xf32>
    %27 = arith.addf %24, %26 : vector<8x4xf32>
    %28 = math.tanh %27 : vector<8x4xf32>
    %29 = vector.broadcast %0 : f32 to vector<8x4xf32>
    %30 = arith.mulf %28, %29 : vector<8x4xf32>
    %c0_25 = arith.constant 0 : index
    %c0_26 = arith.constant 0 : index
    %31 = vector.load %arg11[%c0_25, %c0_26] : memref<8x4xf32, #tpu.memory_space<vmem>>, vector<8x4xf32>
    tpu.vector_store %arg11[%c0_25, %c0_26], %30 {strides = array<i32>} : memref<8x4xf32, #tpu.memory_space<vmem>>, vector<8x4xf32>,
    return
  }
  func.func @transform_0(%arg0: i32) -> (i32, i32) {
    %c0_i32 = arith.constant 0 : i32
    %c0_i32_0 = arith.constant 0 : i32
    %c0_i32_1 = arith.constant 0 : i32
    return %c0_i32, %c0_i32_0 : i32, i32
  }
  func.func @transform_1(%arg0: i32) -> (i32, i32) {
    %c0_i32 = arith.constant 0 : i32
    %c0_i32_0 = arith.constant 0 : i32
    return %arg0, %c0_i32 : i32, i32
  }
  func.func @transform_2(%arg0: i32) -> (i32, i32) {
    %c0_i32 = arith.constant 0 : i32
    %c0_i32_0 = arith.constant 0 : i32
    %c0_i32_1 = arith.constant 0 : i32
    return %c0_i32, %c0_i32_0 : i32, i32
  }
  func.func @transform_3(%arg0: i32) -> (i32, i32) {
    %c0_i32 = arith.constant 0 : i32
    %c0_i32_0 = arith.constant 0 : i32
    %c0_i32_1 = arith.constant 0 : i32
    return %c0_i32, %c0_i32_0 : i32, i32
  }
  func.func @transform_4(%arg0: i32) -> (i32, i32) {
    %c0_i32 = arith.constant 0 : i32
    %c0_i32_0 = arith.constant 0 : i32
    %c0_i32_1 = arith.constant 0 : i32
    return %c0_i32, %c0_i32_0 : i32, i32
  }
  func.func @transform_5(%arg0: i32) -> (i32, i32) {
    %c0_i32 = arith.constant 0 : i32
    %c0_i32_0 = arith.constant 0 : i32
    %c0_i32_1 = arith.constant 0 : i32
    return %c0_i32, %c0_i32_0 : i32, i32
  }
  func.func @transform_6(%arg0: i32) -> (i32, i32) {
    %c0_i32 = arith.constant 0 : i32
    %c0_i32_0 = arith.constant 0 : i32
    %c0_i32_1 = arith.constant 0 : i32
    return %c0_i32, %c0_i32_0 : i32, i32
  }
  func.func @transform_7(%arg0: i32) -> (i32, i32) {
    %c0_i32 = arith.constant 0 : i32
    %c0_i32_0 = arith.constant 0 : i32
    %c0_i32_1 = arith.constant 0 : i32
    return %c0_i32, %c0_i32_0 : i32, i32
  }
  func.func @transform_8(%arg0: i32) -> (i32, i32) {
    %c0_i32 = arith.constant 0 : i32
    %c0_i32_0 = arith.constant 0 : i32
    %c0_i32_1 = arith.constant 0 : i32
    return %c0_i32, %c0_i32_0 : i32, i32
  }
  func.func @transform_9(%arg0: i32) -> (i32, i32) {
    %c0_i32 = arith.constant 0 : i32
    %c0_i32_0 = arith.constant 0 : i32
    %c0_i32_1 = arith.constant 0 : i32
    return %c0_i32, %c0_i32_0 : i32, i32
  }
  func.func @transform_10(%arg0: i32) -> (i32, i32) {
    %c0_i32 = arith.constant 0 : i32
    %c0_i32_0 = arith.constant 0 : i32
    return %arg0, %c0_i32 : i32, i32
  }
}

</mosaic_0001>

<llo_original>
// kernel: tpu_custom_call.1
$region0: #{tpu_custom_call.1}
  #allocation0 [shape = 'u32[]', space=smem, size = 0x4, offset = 0x4, fixed_abs, tag = 'smem constant byte address 0x4 - core index']
  #allocation1 [shape = 'u32[72,128]{1,0:T(1,128)}', space=vmem, size = 0x9000, scoped, tag = 'internal scratch']
  #allocation2 [shape = 'f32[1,1]{1,0:T(1,128)S(6)}', space=smem, size = 0x200, scoped, tag = 'scoped memory for tpu_custom_call.1']
  %s0 = inlined_call_operand.<no memory space> [shape: f32[1,1], index: 0, kind: input, shape index: {}]
  %s1 = inlined_call_operand.vmem [shape: f32[8,8], index: 1, kind: input, shape index: {}]
  %s2 = inlined_call_operand.vmem [shape: f32[8,256], index: 2, kind: input, shape index: {}]
  %s3 = inlined_call_operand.vmem [shape: f32[1,256], index: 3, kind: input, shape index: {}]
  %s4 = inlined_call_operand.hbm [shape: f32[256,128], index: 4, kind: input, shape index: {}]
  %s5 = inlined_call_operand.vmem [shape: f32[1,128], index: 5, kind: input, shape index: {}]
  %s6 = inlined_call_operand.vmem [shape: f32[128,64], index: 6, kind: input, shape index: {}]
  %s7 = inlined_call_operand.vmem [shape: f32[1,64], index: 7, kind: input, shape index: {}]
  %s8 = inlined_call_operand.vmem [shape: f32[64,4], index: 8, kind: input, shape index: {}]
  %s9 = inlined_call_operand.vmem [shape: f32[1,4], index: 9, kind: input, shape index: {}]
  %s10 = inlined_call_operand.vmem [shape: f32[8,4], index: 10, kind: output, shape index: {}]
  %s11 = sld [smem:[#allocation0]]
  $region54: #{tpu_custom_call.1} parent=0
    _
  %s13 = ssub.s32 1, %s11
  %s14 = scalar_select 0, %s13, %s11
  %15 = sst [smem:[#allocation2]] %s0
  $region1: #{tpu_custom_call.1} parent=0
    #allocation3 [shape = 'u8[131072]{0}', space=vmem, size = 0x20000, scoped, tag = 'input window, operand 4, single buffered']
    #allocation4 [shape = 's32[1]{0}', space=sflag, size = 0x4, scoped, tag = 'scoped memory for tpu_custom_call.1']
    %16 = vsyncpa [#allocation4], 0
    // Predicated region
    $region2: #{tpu_custom_call.1} parent=1 // pred_check
      _
    $region3: #{tpu_custom_call.1} parent=1 // pred_check_branch
      %18 = sbr.rel (0) target = $region5
    $region4: #{tpu_custom_call.1} parent=1 // pred_region
      _
    $region5: #{tpu_custom_call.1} parent=1 // pred_fallthru
      _
    // Predicated region
    $region6: #{tpu_custom_call.1} parent=1 // pred_check
      _
    $region7: #{tpu_custom_call.1} parent=1 // pred_check_branch
      %20 = sbr.rel (0) target = $region9
    $region8: #{tpu_custom_call.1} parent=1 // pred_region
      _
    $region9: #{tpu_custom_call.1} parent=1 // pred_fallthru
      _
    // Predicated region
    $region10: #{tpu_custom_call.1} parent=1 // pred_check
      _
    $region11: #{tpu_custom_call.1} parent=1 // pred_check_branch
      %22 = sbr.rel (0) target = $region13
    $region12: #{tpu_custom_call.1} parent=1 // pred_region
      _
    $region13: #{tpu_custom_call.1} parent=1 // pred_fallthru
      _
    // Predicated region
    $region14: #{tpu_custom_call.1} parent=1 // pred_check
      _
    $region15: #{tpu_custom_call.1} parent=1 // pred_check_branch
      %24 = sbr.rel (0) target = $region17
    $region16: #{tpu_custom_call.1} parent=1 // pred_region
      _
    $region17: #{tpu_custom_call.1} parent=1 // pred_fallthru
      _
    // Predicated region
    $region18: #{tpu_custom_call.1} parent=1 // pred_check
      _
    $region19: #{tpu_custom_call.1} parent=1 // pred_check_branch
      %26 = sbr.rel (0) target = $region21
    $region20: #{tpu_custom_call.1} parent=1 // pred_region
      %28 = vsyncadd [#allocation4], 0
      %s29 = sshll.u32 %s4, 4
      %s30 = int_to_ptr.hbm [resolvable:$true] %s29
      %s31 = sshll.u32 [#allocation3], 4
      %s32 = int_to_ptr.vmem [resolvable:$true] %s31
      %37 = dma.hbm_to_vmem [thread:$0]  %s30, 4096, %s32, [#allocation4], 128, 128, 8
    $region21: #{tpu_custom_call.1} parent=1 // pred_fallthru
      _
    // Predicated region
    $region22: #{tpu_custom_call.1} parent=1 // pred_check
      _
    $region23: #{tpu_custom_call.1} parent=1 // pred_check_branch
      %39 = sbr.rel (0) target = $region25
    $region24: #{tpu_custom_call.1} parent=1 // pred_region
      _
    $region25: #{tpu_custom_call.1} parent=1 // pred_fallthru
      _
    // Predicated region
    $region26: #{tpu_custom_call.1} parent=1 // pred_check
      _
    $region27: #{tpu_custom_call.1} parent=1 // pred_check_branch
      %41 = sbr.rel (0) target = $region29
    $region28: #{tpu_custom_call.1} parent=1 // pred_region
      _
    $region29: #{tpu_custom_call.1} parent=1 // pred_fallthru
      _
    // Predicated region
    $region30: #{tpu_custom_call.1} parent=1 // pred_check
      _
    $region31: #{tpu_custom_call.1} parent=1 // pred_check_branch
      %43 = sbr.rel (0) target = $region33
    $region32: #{tpu_custom_call.1} parent=1 // pred_region
      _
    $region33: #{tpu_custom_call.1} parent=1 // pred_fallthru
      _
    // Predicated region
    $region34: #{tpu_custom_call.1} parent=1 // pred_check
      _
    $region35: #{tpu_custom_call.1} parent=1 // pred_check_branch
      %45 = sbr.rel (0) target = $region37
    $region36: #{tpu_custom_call.1} parent=1 // pred_region
      _
    $region37: #{tpu_custom_call.1} parent=1 // pred_fallthru
      _
    // Predicated region
    $region38: #{tpu_custom_call.1} parent=1 // pred_check
      _
    $region39: #{tpu_custom_call.1} parent=1 // pred_check_branch
      %47 = sbr.rel (0) target = $region41
    $region40: #{tpu_custom_call.1} parent=1 // pred_region
      _
    $region41: #{tpu_custom_call.1} parent=1 // pred_fallthru
      _
    // Predicated region
    $region42: #{tpu_custom_call.1} parent=1 // pred_check
      _
    $region43: #{tpu_custom_call.1} parent=1 // pred_check_branch
      %49 = sbr.rel (0) target = $region45
    $region44: #{tpu_custom_call.1} parent=1 // pred_region
      %51 = dma.done [#allocation4], 4096
    $region45: #{tpu_custom_call.1} parent=1 // pred_fallthru
      _
    %s52 = sld [smem:[#allocation2]]
    %v53 = vld [vmem:[%s1] sm:$0xff]
    %v54 = vld [vmem:[%s2] sm:$0xff]
    %v55 = vld [vmem:[%s2 + $0x8] sm:$0xff]
    %v56 = vld [vmem:[%s3] sm:$0x3]
    %v58 = vperm.slane %v56, 0
    %v59 = vperm.slane %v56, 1
    %vm62 = vcmask 64512
    %v64 = vsel %vm62, %v53, 0
    %66 = vmatpush.msra.mxu0 0.0
    %67 = vmatpush.msra.mxu0 0.0
    %68 = vmatpush.msra.mxu0 0.0
    %69 = vmatpush.msra.mxu0 0.0
    %70 = vmatpush.msra.mxu0 0.0
    %71 = vmatpush.msra.mxu0 0.0
    %72 = vmatpush.msra.mxu0 0.0
    %73 = vmatpush.msra.mxu0 0.0
    %74 = vmatpush.msra.mxu0 0.0
    %75 = vmatpush.msra.mxu0 0.0
    %76 = vmatpush.msra.mxu0 0.0
    %77 = vmatpush.msra.mxu0 0.0
    %78 = vmatpush.msra.mxu0 0.0
    %79 = vmatpush.msra.mxu0 0.0
    %80 = vmatpush.msra.mxu0 0.0
    %81 = vmatpush.msra.mxu0 %v54
    %82 = vmatmul.f32.gmra.mxu0 %v64
    %v83 = vpop.f32.mrf.mxu0
    %v84 = vadd.f32 %v58, %v83
    %85 = vdwg.mxu0
    %86 = vmatpush.msra.mxu0 0.0
    %87 = vmatpush.msra.mxu0 0.0
    %88 = vmatpush.msra.mxu0 0.0
    %89 = vmatpush.msra.mxu0 0.0
    %90 = vmatpush.msra.mxu0 0.0
    %91 = vmatpush.msra.mxu0 0.0
    %92 = vmatpush.msra.mxu0 0.0
    %93 = vmatpush.msra.mxu0 0.0
    %94 = vmatpush.msra.mxu0 0.0
    %95 = vmatpush.msra.mxu0 0.0
    %96 = vmatpush.msra.mxu0 0.0
    %97 = vmatpush.msra.mxu0 0.0
    %98 = vmatpush.msra.mxu0 0.0
    %99 = vmatpush.msra.mxu0 0.0
    %100 = vmatpush.msra.mxu0 0.0
    %101 = vmatpush.msra.mxu0 %v55
    %102 = vmatmul.f32.gmra.mxu0 %v64
    %v103 = vpop.f32.mrf.mxu0
    %v104 = vadd.f32 %v59, %v103
    %105 = vdwg.mxu0
    %v106 = vmax.f32 %v84, 0.0
    %v107 = vmax.f32 %v104, 0.0
    %v108 = vld [vmem:[#allocation3] sm:$0xff]
    %v109 = vld [vmem:[#allocation3 + $0x8] sm:$0xff]
    %v110 = vld [vmem:[#allocation3 + $0x10] sm:$0xff]
    %v111 = vld [vmem:[#allocation3 + $0x18] sm:$0xff]
    %v112 = vld [vmem:[#allocation3 + $0x20] sm:$0xff]
    %v113 = vld [vmem:[#allocation3 + $0x28] sm:$0xff]
    %v114 = vld [vmem:[#allocation3 + $0x30] sm:$0xff]
    %v115 = vld [vmem:[#allocation3 + $0x38] sm:$0xff]
    %v116 = vld [vmem:[#allocation3 + $0x40] sm:$0xff]
    %v117 = vld [vmem:[#allocation3 + $0x48] sm:$0xff]
    %v118 = vld [vmem:[#allocation3 + $0x50] sm:$0xff]
    %v119 = vld [vmem:[#allocation3 + $0x58] sm:$0xff]
    %v120 = vld [vmem:[#allocation3 + $0x60] sm:$0xff]
    %v121 = vld [vmem:[#allocation3 + $0x68] sm:$0xff]
    %v122 = vld [vmem:[#allocation3 + $0x70] sm:$0xff]
    %v123 = vld [vmem:[#allocation3 + $0x78] sm:$0xff]
    %v124 = vld [vmem:[#allocation3 + $0x80] sm:$0xff]
    %v125 = vld [vmem:[#allocation3 + $0x88] sm:$0xff]
    %v126 = vld [vmem:[#allocation3 + $0x90] sm:$0xff]
    %v127 = vld [vmem:[#allocation3 + $0x98] sm:$0xff]
    %v128 = vld [vmem:[#allocation3 + $0xa0] sm:$0xff]
    %v129 = vld [vmem:[#allocation3 + $0xa8] sm:$0xff]
    %v130 = vld [vmem:[#allocation3 + $0xb0] sm:$0xff]
    %v131 = vld [vmem:[#allocation3 + $0xb8] sm:$0xff]
    %v132 = vld [vmem:[#allocation3 + $0xc0] sm:$0xff]
    %v133 = vld [vmem:[#allocation3 + $0xc8] sm:$0xff]
    %v134 = vld [vmem:[#allocation3 + $0xd0] sm:$0xff]
    %v135 = vld [vmem:[#allocation3 + $0xd8] sm:$0xff]
    %v136 = vld [vmem:[#allocation3 + $0xe0] sm:$0xff]
    %v137 = vld [vmem:[#allocation3 + $0xe8] sm:$0xff]
    %v138 = vld [vmem:[#allocation3 + $0xf0] sm:$0xff]
    %v139 = vld [vmem:[#allocation3 + $0xf8] sm:$0xff]
    %v140 = vld [vmem:[%s5] sm:$0x1]
    %v142 = vperm.slane %v140, 0
    %144 = vmatpush.msra.mxu0 %v123
    %145 = vmatpush.msra.mxu0 %v122
    %146 = vmatpush.msra.mxu0 %v121
    %147 = vmatpush.msra.mxu0 %v120
    %148 = vmatpush.msra.mxu0 %v119
    %149 = vmatpush.msra.mxu0 %v118
    %150 = vmatpush.msra.mxu0 %v117
    %151 = vmatpush.msra.mxu0 %v116
    %152 = vmatpush.msra.mxu0 %v115
    %153 = vmatpush.msra.mxu0 %v114
    %154 = vmatpush.msra.mxu0 %v113
    %155 = vmatpush.msra.mxu0 %v112
    %156 = vmatpush.msra.mxu0 %v111
    %157 = vmatpush.msra.mxu0 %v110
    %158 = vmatpush.msra.mxu0 %v109
    %159 = vmatpush.msra.mxu0 %v108
    %160 = vmatmul.f32.gmra.mxu0 %v106
    %v161 = vpop.f32.mrf.mxu0
    %v162 = vadd.f32 %v142, %v161
    %163 = vdwg.mxu0
    %164 = vmatpush.msra.mxu0 %v139
    %165 = vmatpush.msra.mxu0 %v138
    %166 = vmatpush.msra.mxu0 %v137
    %167 = vmatpush.msra.mxu0 %v136
    %168 = vmatpush.msra.mxu0 %v135
    %169 = vmatpush.msra.mxu0 %v134
    %170 = vmatpush.msra.mxu0 %v133
    %171 = vmatpush.msra.mxu0 %v132
    %172 = vmatpush.msra.mxu0 %v131
    %173 = vmatpush.msra.mxu0 %v130
    %174 = vmatpush.msra.mxu0 %v129
    %175 = vmatpush.msra.mxu0 %v128
    %176 = vmatpush.msra.mxu0 %v127
    %177 = vmatpush.msra.mxu0 %v126
    %178 = vmatpush.msra.mxu0 %v125
    %179 = vmatpush.msra.mxu0 %v124
    %180 = vmatmul.f32.gmra.mxu0 %v107
    %v181 = vpop.f32.mrf.mxu0
    %v182 = vadd.f32 %v162, %v181
    %183 = vdwg.mxu0
    %v184 = vmax.f32 %v182, 0.0
    %v185 = vld [vmem:[%s6] sm:$0xff]
    %v186 = vld [vmem:[%s6 + $0x8] sm:$0xff]
    %v187 = vld [vmem:[%s6 + $0x10] sm:$0xff]
    %v188 = vld [vmem:[%s6 + $0x18] sm:$0xff]
    %v189 = vld [vmem:[%s6 + $0x20] sm:$0xff]
    %v190 = vld [vmem:[%s6 + $0x28] sm:$0xff]
    %v191 = vld [vmem:[%s6 + $0x30] sm:$0xff]
    %v192 = vld [vmem:[%s6 + $0x38] sm:$0xff]
    %v193 = vld [vmem:[%s6 + $0x40] sm:$0xff]
    %v194 = vld [vmem:[%s6 + $0x48] sm:$0xff]
    %v195 = vld [vmem:[%s6 + $0x50] sm:$0xff]
    %v196 = vld [vmem:[%s6 + $0x58] sm:$0xff]
    %v197 = vld [vmem:[%s6 + $0x60] sm:$0xff]
    %v198 = vld [vmem:[%s6 + $0x68] sm:$0xff]
    %v199 = vld [vmem:[%s6 + $0x70] sm:$0xff]
    %v200 = vld [vmem:[%s6 + $0x78] sm:$0xff]
    %v201 = vld [vmem:[%s7] sm:$0x1]
    %v203 = vperm.slane %v201, 0
    %205 = vmatpush.msra.mxu0 %v200
    %206 = vmatpush.msra.mxu0 %v199
    %207 = vmatpush.msra.mxu0 %v198
    %208 = vmatpush.msra.mxu0 %v197
    %209 = vmatpush.msra.mxu0 %v196
    %210 = vmatpush.msra.mxu0 %v195
    %211 = vmatpush.msra.mxu0 %v194
    %212 = vmatpush.msra.mxu0 %v193
    %213 = vmatpush.msra.mxu0 %v192
    %214 = vmatpush.msra.mxu0 %v191
    %215 = vmatpush.msra.mxu0 %v190
    %216 = vmatpush.msra.mxu0 %v189
    %217 = vmatpush.msra.mxu0 %v188
    %218 = vmatpush.msra.mxu0 %v187
    %219 = vmatpush.msra.mxu0 %v186
    %220 = vmatpush.msra.mxu0 %v185
    %221 = vmatmul.f32.gmra.mxu0 %v184
    %v222 = vpop.f32.mrf.mxu0
    %v223 = vadd.f32 %v203, %v222
    %224 = vdwg.mxu0
    %v225 = vmax.f32 %v223, 0.0
    %v226 = vld [vmem:[%s8] sm:$0xff]
    %v227 = vld [vmem:[%s8 + $0x8] sm:$0xff]
    %v228 = vld [vmem:[%s8 + $0x10] sm:$0xff]
    %v229 = vld [vmem:[%s8 + $0x18] sm:$0xff]
    %v230 = vld [vmem:[%s8 + $0x20] sm:$0xff]
    %v231 = vld [vmem:[%s8 + $0x28] sm:$0xff]
    %v232 = vld [vmem:[%s8 + $0x30] sm:$0xff]
    %v233 = vld [vmem:[%s8 + $0x38] sm:$0xff]
    %v234 = vld [vmem:[%s9] sm:$0x1]
    %v236 = vperm.slane %v234, 0
    %vm238 = vcmask 523264
    %v240 = vsel %vm238, %v225, 0
    %242 = vmatpush.msra.mxu0 0.0
    %243 = vmatpush.msra.mxu0 0.0
    %244 = vmatpush.msra.mxu0 0.0
    %245 = vmatpush.msra.mxu0 0.0
    %246 = vmatpush.msra.mxu0 0.0
    %247 = vmatpush.msra.mxu0 0.0
    %248 = vmatpush.msra.mxu0 0.0
    %249 = vmatpush.msra.mxu0 0.0
    %250 = vmatpush.msra.mxu0 %v233
    %251 = vmatpush.msra.mxu0 %v232
    %252 = vmatpush.msra.mxu0 %v231
    %253 = vmatpush.msra.mxu0 %v230
    %254 = vmatpush.msra.mxu0 %v229
    %255 = vmatpush.msra.mxu0 %v228
    %256 = vmatpush.msra.mxu0 %v227
    %257 = vmatpush.msra.mxu0 %v226
    %258 = vmatmul.f32.gmra.mxu0 %v240
    %v259 = vpop.f32.mrf.mxu0
    %v260 = vadd.f32 %v236, %v259
    %261 = vdwg.mxu0
    %v262 = vtanh.pop %v260
    %v263 = vstv %s52
    %v264 = vmul.f32 %v262, %v263
    %vm265 = vcmask 31744
    %266 = vst.msk [vmem:[%s10] sm:$0xff] %vm265, %v264
    // Predicated region
    $region46: #{tpu_custom_call.1} parent=1 // pred_check
      _
    $region47: #{tpu_custom_call.1} parent=1 // pred_check_branch
      %268 = sbr.rel (0) target = $region49
    $region48: #{tpu_custom_call.1} parent=1 // pred_region
      _
    $region49: #{tpu_custom_call.1} parent=1 // pred_fallthru
      _
    // Predicated region
    $region50: #{tpu_custom_call.1} parent=1 // pred_check
      _
    $region51: #{tpu_custom_call.1} parent=1 // pred_check_branch
      %270 = sbr.rel (0) target = $region53
    $region52: #{tpu_custom_call.1} parent=1 // pred_region
      _
    $region53: #{tpu_custom_call.1} parent=1 // pred_fallthru
      _
    %271 = vsyncpa [#allocation4], 1

</llo_original>
